<compile_context>
chip_gen: v7x
topology: tpu7x:2x2x1
jax: 0.10.0
libtpu: 0.0.40
codegen_flags: <defaults>
</compile_context>

<pallas_src>
import jax
import jax.numpy as jnp
from jax.experimental import pallas as pl
from jax.experimental.pallas import tpu as pltpu

PADDING_IDX = 1


def _round_up(x, m):
    return (x + m - 1) // m * m


def _make_embed_kernel(v_chunk):
    def kernel(ids_ref, emb_ref, out_ref, acc_ref):
        v = pl.program_id(1)

        @pl.when(v == 0)
        def _init():
            acc_ref[...] = jnp.zeros_like(acc_ref)

        tile = ids_ref.shape[0]
        # one_hot[t, c] = (v * v_chunk + c == ids[t])  -> exactly one 1.0 per token row.
        col = jax.lax.broadcasted_iota(jnp.int32, (tile, v_chunk), 1) + v * v_chunk
        one_hot = (col == ids_ref[...]).astype(emb_ref.dtype)
        # Row gather expressed as an MXU matmul over this V-chunk.
        acc_ref[...] += jnp.dot(
            one_hot,
            emb_ref[...],
            preferred_element_type=jnp.float32,
            precision=jax.lax.Precision.HIGHEST,
        )

        @pl.when(v == pl.num_programs(1) - 1)
        def _store():
            out_ref[...] = acc_ref[...].astype(out_ref.dtype)

    return kernel


def pre_embedding(x, embedding, padding_idx=PADDING_IDX, permuting=True, tracking=True):
    """JAX/Pallas equivalent of PreEmbedding.forward.

    Args:
      x:          (N, L) int32 token ids.
      embedding:  (V, D) float32 pretrained embedding table.
    Returns:
      (fmap, lengths) with fmap (N, D, L) if permuting else (N, L, D); lengths (N,)
      int32; or just fmap if tracking=False.
    """
    N, L = x.shape
    V, D = embedding.shape
    T = N * L
    itemsize = jnp.dtype(embedding.dtype).itemsize

    # Token tile: sublane-full (multiple of 8), up to 256 tokens per grid step.
    tile = min(256, _round_up(T, 8))
    t_pad = _round_up(T, tile)

    # Lane-dense embedding dim; V padded to MXU-friendly multiples of 128.
    d_pad = _round_up(D, 128)
    v_pad = _round_up(V, 128)

    # Chunk V so one (v_chunk, d_pad) table block stays <= ~4 MiB: fits every
    # generation's scoped VMEM with double buffering (v5e 16 MiB default,
    # v6e 32/128 MiB, v7x 32/64 MiB).
    chunk_budget = 4 * 1024 * 1024
    max_rows = max(128, (chunk_budget // (d_pad * itemsize)) // 128 * 128)
    v_chunk = min(v_pad, max_rows)
    v_pad = _round_up(v_pad, v_chunk)

    emb_pad = embedding
    if (v_pad, d_pad) != (V, D):
        emb_pad = jnp.pad(embedding, ((0, v_pad - V), (0, d_pad - D)))

    flat_ids = x.reshape(-1).astype(jnp.int32)
    if t_pad != T:
        flat_ids = jnp.pad(flat_ids, (0, t_pad - T))  # pad tokens gather row 0; sliced off below
    ids_col = flat_ids.reshape(t_pad, 1)

    grid = (t_pad // tile, v_pad // v_chunk)

    # VMEM budget: double-buffered ids / table-chunk / out blocks + f32 accumulator.
    needed = (
        2 * (tile * 128 * 4 + v_chunk * d_pad * itemsize + tile * d_pad * itemsize)
        + tile * d_pad * 4
        + (1 << 20)  # slack
    )
    vmem_limit = None if needed <= (16 << 20) else int(min(needed, 48 << 20))

    gathered = pl.pallas_call(
        _make_embed_kernel(v_chunk),
        out_shape=jax.ShapeDtypeStruct((t_pad, d_pad), embedding.dtype),
        grid_spec=pltpu.PrefetchScalarGridSpec(
            num_scalar_prefetch=0,
            grid=grid,
            in_specs=[
                pl.BlockSpec((tile, 1), lambda i, v: (i, 0)),         # token ids (TILE per step)
                pl.BlockSpec((v_chunk, d_pad), lambda i, v: (v, 0)),  # table chunk (resident if 1 chunk)
            ],
            out_specs=pl.BlockSpec((tile, d_pad), lambda i, v: (i, 0)),
            scratch_shapes=[pltpu.VMEM((tile, d_pad), jnp.float32)],
        ),
        compiler_params=pltpu.CompilerParams(
            dimension_semantics=("parallel", "arbitrary"),
            vmem_limit_bytes=vmem_limit,
        ),
    )(ids_col, emb_pad)

    fmap = gathered[:T, :D].reshape(N, L, D)
    if permuting:
        # With L < 128 an in-kernel (D, L) store would be lane-sparse; the XLA
        # transpose is the recommended path here (see perf review).
        fmap = jnp.transpose(fmap, (0, 2, 1))

    if not tracking:
        return fmap

    # Lengths: byte-trivial (N, L) compare+reduce; left to XLA instead of paying a
    # second kernel launch and an extra HBM read of x.
    lengths = jnp.sum((x != padding_idx).astype(jnp.int32), axis=1)
    return fmap, lengths


if __name__ == "__main__":
    key = jax.random.PRNGKey(0)
    k_emb, k_ids = jax.random.split(key)

    # Small synthetic config: vocab=100, embedding dim=128, batch=2, seq=8.
    N, L, V, D = 2, 8, 100, 128
    embedding = jax.random.normal(k_emb, (V, D), dtype=jnp.float32)
    x = jax.random.randint(k_ids, (N, L), 0, V, dtype=jnp.int32)
    # Force some padding tokens so the tracked lengths are non-trivial.
    x = x.at[0, 5:].set(PADDING_IDX)
    x = x.at[1, 6:].set(PADDING_IDX)

    fmap, lengths = pre_embedding(x, embedding)
    fmap, lengths = jax.block_until_ready((fmap, lengths))

    # Reference (plain JAX) check of exact semantics.
    ref_fmap = jnp.transpose(jnp.take(embedding, x, axis=0), (0, 2, 1))
    ref_len = jnp.sum(x != PADDING_IDX, axis=1).astype(jnp.int32)
    assert fmap.shape == (N, D, L) and fmap.dtype == jnp.float32
    assert lengths.shape == (N,) and lengths.dtype == jnp.int32
    assert jnp.allclose(fmap, ref_fmap, atol=1e-4, rtol=1e-4)
    assert jnp.array_equal(lengths, ref_len)

    # Exercise the non-permuting / non-tracking path once as well.
    fmap_nt = jax.block_until_ready(
        pre_embedding(x, embedding, permuting=False, tracking=False)
    )
    assert fmap_nt.shape == (N, L, D)
    assert jnp.allclose(fmap_nt, jnp.take(embedding, x, axis=0), atol=1e-4, rtol=1e-4)

    print("KERNEL_OK")
</pallas_src>

<mosaic_0001>
module attributes {stable_mosaic.version = 11 : i64} {
  func.func @kernel(%arg0: i32, %arg1: i32, %arg2: memref<16x1xi32, #tpu.memory_space<vmem>>, %arg3: memref<128x128xf32, #tpu.memory_space<vmem>>, %arg4: memref<16x128xf32, #tpu.memory_space<vmem>>, %arg5: memref<16x128xf32, #tpu.memory_space<vmem>>) attributes {dimension_semantics = [#tpu.dimension_semantics<parallel>, #tpu.dimension_semantics<arbitrary>], iteration_bounds = array<i64: 1, 1>, scalar_prefetch = 0 : i64, scratch_operands = 1 : i64, tpu.core_type = #tpu.core_type<tc>, window_params = [{transform_indices = @transform_0, window_bounds = array<i64: 16, 1>}, {transform_indices = @transform_1, window_bounds = array<i64: 128, 128>}, {transform_indices = @transform_2, window_bounds = array<i64: 16, 128>}]} {
    %c0_i32 = arith.constant 0 : i32
    %0 = arith.cmpi eq, %arg1, %c0_i32 : i32
    %1 = arith.extui %0 : i1 to i32
    %c0_i32_0 = arith.constant 0 : i32
    %2 = arith.cmpi ne, %1, %c0_i32_0 : i32
    scf.if %2 {
      %cst_10 = arith.constant 0.000000e+00 : f32
      %20 = vector.broadcast %cst_10 : f32 to vector<16x128xf32>
      %c0_11 = arith.constant 0 : index
      %c0_12 = arith.constant 0 : index
      %21 = vector.load %arg5[%c0_11, %c0_12] : memref<16x128xf32, #tpu.memory_space<vmem>>, vector<16x128xf32>
      tpu.vector_store %arg5[%c0_11, %c0_12], %20 {strides = array<i32>} : memref<16x128xf32, #tpu.memory_space<vmem>>, vector<16x128xf32>,
    } else {
    }
    %3 = tpu.iota {dimensions = array<i32: 1>} : vector<16x128xi32>
    %c128_i32 = arith.constant 128 : i32
    %4 = arith.muli %arg1, %c128_i32 : i32
    %5 = vector.broadcast %4 : i32 to vector<16x128xi32>
    %6 = arith.addi %3, %5 : vector<16x128xi32>
    %c0 = arith.constant 0 : index
    %c0_1 = arith.constant 0 : index
    %7 = vector.load %arg2[%c0, %c0_1] : memref<16x1xi32, #tpu.memory_space<vmem>>, vector<16x1xi32>
    %8 = vector.broadcast %7 : vector<16x1xi32> to vector<16x128xi32>
    %9 = arith.cmpi eq, %6, %8 : vector<16x128xi32>
    %10 = arith.extui %9 : vector<16x128xi1> to vector<16x128xi32>
    %11 = arith.sitofp %10 : vector<16x128xi32> to vector<16x128xf32>
    %c0_2 = arith.constant 0 : index
    %c0_3 = arith.constant 0 : index
    %12 = vector.load %arg5[%c0_2, %c0_3] : memref<16x128xf32, #tpu.memory_space<vmem>>, vector<16x128xf32>
    %c0_4 = arith.constant 0 : index
    %c0_5 = arith.constant 0 : index
    %13 = vector.load %arg3[%c0_4, %c0_5] : memref<128x128xf32, #tpu.memory_space<vmem>>, vector<128x128xf32>
    %cst = arith.constant dense<0.000000e+00> : vector<16x128xf32>
    %14 = tpu.matmul %11, %13, %cst {dimension_numbers = #tpu.dot_dimension_numbers<[1], [0], [0], [1], [0, 0, 1, 1], [], []>, precision = #tpu.contract_precision<fp32>} : vector<16x128xf32>, vector<128x128xf32>, vector<16x128xf32> -> vector<16x128xf32>
    %15 = arith.addf %12, %14 : vector<16x128xf32>
    %c0_6 = arith.constant 0 : index
    %c0_7 = arith.constant 0 : index
    %16 = vector.load %arg5[%c0_6, %c0_7] : memref<16x128xf32, #tpu.memory_space<vmem>>, vector<16x128xf32>
    tpu.vector_store %arg5[%c0_6, %c0_7], %15 {strides = array<i32>} : memref<16x128xf32, #tpu.memory_space<vmem>>, vector<16x128xf32>,
    %c0_i32_8 = arith.constant 0 : i32
    %17 = arith.cmpi eq, %arg1, %c0_i32_8 : i32
    %18 = arith.extui %17 : i1 to i32
    %c0_i32_9 = arith.constant 0 : i32
    %19 = arith.cmpi ne, %18, %c0_i32_9 : i32
    scf.if %19 {
      %c0_10 = arith.constant 0 : index
      %c0_11 = arith.constant 0 : index
      %20 = vector.load %arg5[%c0_10, %c0_11] : memref<16x128xf32, #tpu.memory_space<vmem>>, vector<16x128xf32>
      %c0_12 = arith.constant 0 : index
      %c0_13 = arith.constant 0 : index
      %21 = vector.load %arg4[%c0_12, %c0_13] : memref<16x128xf32, #tpu.memory_space<vmem>>, vector<16x128xf32>
      tpu.vector_store %arg4[%c0_12, %c0_13], %20 {strides = array<i32>} : memref<16x128xf32, #tpu.memory_space<vmem>>, vector<16x128xf32>,
    } else {
    }
    return
  }
  func.func @transform_0(%arg0: i32, %arg1: i32) -> (i32, i32) {
    %c0_i32 = arith.constant 0 : i32
    %c0_i32_0 = arith.constant 0 : i32
    return %arg0, %c0_i32 : i32, i32
  }
  func.func @transform_1(%arg0: i32, %arg1: i32) -> (i32, i32) {
    %c0_i32 = arith.constant 0 : i32
    %c0_i32_0 = arith.constant 0 : i32
    return %arg1, %c0_i32 : i32, i32
  }
  func.func @transform_2(%arg0: i32, %arg1: i32) -> (i32, i32) {
    %c0_i32 = arith.constant 0 : i32
    %c0_i32_0 = arith.constant 0 : i32
    return %arg0, %c0_i32 : i32, i32
  }
}

</mosaic_0001>

<llo_original>
// kernel: tpu_custom_call.1
$region0: #{tpu_custom_call.1}
  #allocation0 [shape = 'u32[]', space=smem, size = 0x4, offset = 0x4, fixed_abs, tag = 'smem constant byte address 0x4 - core index']
  #allocation1 [shape = 'u32[144,128]{1,0:T(1,128)}', space=vmem, size = 0x12000, scoped, tag = 'internal scratch']
  #allocation2 [shape = 'f32[16,128]{1,0:T(8,128)}', space=vmem, size = 0x2000, scoped, tag = 'scratch operand']
  %s0 = inlined_call_operand.vmem [shape: s32[16,1], index: 0, kind: input, shape index: {}]
  %s1 = inlined_call_operand.hbm [shape: f32[128,128], index: 1, kind: input, shape index: {}]
  %s2 = inlined_call_operand.hbm [shape: f32[16,128], index: 2, kind: output, shape index: {}]
  %s3 = sld [smem:[#allocation0]]
  $region30: #{tpu_custom_call.1} parent=0
    _
  %s5 = ssub.s32 1, %s3
  %s6 = scalar_select 0, %s5, %s3
  $region1: #{tpu_custom_call.1} parent=0
    #allocation3 [shape = 'u8[65536]{0}', space=vmem, size = 0x10000, scoped, tag = 'input window, operand 1, single buffered']
    #allocation4 [shape = 's32[1]{0}', space=sflag, size = 0x4, scoped, tag = 'scoped memory for tpu_custom_call.1']
    #allocation5 [shape = 's32[1]{0}', space=sflag, size = 0x4, scoped, tag = 'scoped memory for tpu_custom_call.1']
    #allocation6 [shape = 'u8[8192]{0}', space=vmem, size = 0x2000, scoped, tag = 'output window, operand 0, single buffered']
    %7 = vsyncpa [#allocation4], 0
    %8 = vsyncpa [#allocation5], 0
    // Predicated region
    $region2: #{tpu_custom_call.1} parent=1 // pred_check
      _
    $region3: #{tpu_custom_call.1} parent=1 // pred_check_branch
      %10 = sbr.rel (0) target = $region5
    $region4: #{tpu_custom_call.1} parent=1 // pred_region
      _
    $region5: #{tpu_custom_call.1} parent=1 // pred_fallthru
      _
    // Predicated region
    $region6: #{tpu_custom_call.1} parent=1 // pred_check
      _
    $region7: #{tpu_custom_call.1} parent=1 // pred_check_branch
      %12 = sbr.rel (0) target = $region9
    $region8: #{tpu_custom_call.1} parent=1 // pred_region
      %s14 = ssub.s32 2048, 2048
      %15 = vsyncadd [#allocation4], %s14
      %s16 = sshll.u32 [#allocation3], 4
      %s17 = int_to_ptr.vmem [resolvable:$true] %s16
      %22 = dma.hbm_to_vmem [thread:$0]  %s1, 2048, %s17, [#allocation4], 128, 128, 8
    $region9: #{tpu_custom_call.1} parent=1 // pred_fallthru
      _
    // Predicated region
    $region10: #{tpu_custom_call.1} parent=1 // pred_check
      _
    $region11: #{tpu_custom_call.1} parent=1 // pred_check_branch
      %24 = sbr.rel (0) target = $region13
    $region12: #{tpu_custom_call.1} parent=1 // pred_region
      %25 = dma.done [#allocation4], 2048
    $region13: #{tpu_custom_call.1} parent=1 // pred_fallthru
      _
    %p26 = scmp.eq.s32.totalorder 0, 0
    // Predicated region
    $region14: #{tpu_custom_call.1} parent=1 // pred_check
      %p27 = pneg %p26
    $region15: #{tpu_custom_call.1} parent=1 // pred_check_branch
      %29 = sbr.rel (%p27) target = $region17
    $region16: #{tpu_custom_call.1} parent=1 // pred_region
      %30 = vst [vmem:[#allocation2] sm:$0xff] 0.0
      %31 = vst [vmem:[#allocation2 + $0x8] sm:$0xff] 0.0
    $region17: #{tpu_custom_call.1} parent=1 // pred_fallthru
      _
    %v32 = vlaneseq
    %v33 = vand.u32 %v32, 127
    %s34 = smul.u32 0, 128
    %v35 = vstv %s34
    %v36 = vadd.s32 %v33, %v35
    %v37 = vld [vmem:[%s0] sm:$0xff]
    %v38 = vld [vmem:[%s0 + $0x8] sm:$0xff]
    %39 = vset.pattern.permute.xlu0 0
    %40 = vperm.xlu0 %39, %v37
    %v41 = vpop.permute.xlu0 %40
    %42 = vset.pattern.permute.xlu0 0
    %43 = vperm.xlu0 %42, %v38
    %v44 = vpop.permute.xlu0 %43
    %vm45 = vcmp.eq.s32.totalorder %v36, %v41
    %vm46 = vcmp.eq.s32.totalorder %v36, %v44
    %v47 = vsel %vm45, 1, 0
    %v48 = vsel %vm46, 1, 0
    %v49 = vcvt.s32.f32 %v47
    %v50 = vcvt.s32.f32 %v48
    %v51 = vld [vmem:[#allocation2] sm:$0xff]
    %v52 = vld [vmem:[#allocation2 + $0x8] sm:$0xff]
    %v53 = vld [vmem:[#allocation3] sm:$0xff]
    %v54 = vld [vmem:[#allocation3 + $0x8] sm:$0xff]
    %v55 = vld [vmem:[#allocation3 + $0x10] sm:$0xff]
    %v56 = vld [vmem:[#allocation3 + $0x18] sm:$0xff]
    %v57 = vld [vmem:[#allocation3 + $0x20] sm:$0xff]
    %v58 = vld [vmem:[#allocation3 + $0x28] sm:$0xff]
    %v59 = vld [vmem:[#allocation3 + $0x30] sm:$0xff]
    %v60 = vld [vmem:[#allocation3 + $0x38] sm:$0xff]
    %v61 = vld [vmem:[#allocation3 + $0x40] sm:$0xff]
    %v62 = vld [vmem:[#allocation3 + $0x48] sm:$0xff]
    %v63 = vld [vmem:[#allocation3 + $0x50] sm:$0xff]
    %v64 = vld [vmem:[#allocation3 + $0x58] sm:$0xff]
    %v65 = vld [vmem:[#allocation3 + $0x60] sm:$0xff]
    %v66 = vld [vmem:[#allocation3 + $0x68] sm:$0xff]
    %v67 = vld [vmem:[#allocation3 + $0x70] sm:$0xff]
    %v68 = vld [vmem:[#allocation3 + $0x78] sm:$0xff]
    %69 = vmatprep.subr.mxu0 0.0
    %v70 = vand.u32 %v53, 4294901760
    %71 = vmatpush1.msra.mxu0 %v70
    %72 = vmatprep.subr.mxu0 0.0
    %v73 = vand.u32 %v54, 4294901760
    %74 = vmatpush1.msra.mxu0 %v73
    %75 = vmatprep.subr.mxu0 0.0
    %v76 = vand.u32 %v55, 4294901760
    %77 = vmatpush1.msra.mxu0 %v76
    %78 = vmatprep.subr.mxu0 0.0
    %v79 = vand.u32 %v56, 4294901760
    %80 = vmatpush1.msra.mxu0 %v79
    %81 = vmatprep.subr.mxu0 0.0
    %v82 = vand.u32 %v57, 4294901760
    %83 = vmatpush1.msra.mxu0 %v82
    %84 = vmatprep.subr.mxu0 0.0
    %v85 = vand.u32 %v58, 4294901760
    %86 = vmatpush1.msra.mxu0 %v85
    %87 = vmatprep.subr.mxu0 0.0
    %v88 = vand.u32 %v59, 4294901760
    %89 = vmatpush1.msra.mxu0 %v88
    %90 = vmatprep.subr.mxu0 0.0
    %v91 = vand.u32 %v60, 4294901760
    %92 = vmatpush1.msra.mxu0 %v91
    %93 = vmatprep.subr.mxu0 0.0
    %v94 = vand.u32 %v61, 4294901760
    %95 = vmatpush1.msra.mxu0 %v94
    %96 = vmatprep.subr.mxu0 0.0
    %v97 = vand.u32 %v62, 4294901760
    %98 = vmatpush1.msra.mxu0 %v97
    %99 = vmatprep.subr.mxu0 0.0
    %v100 = vand.u32 %v63, 4294901760
    %101 = vmatpush1.msra.mxu0 %v100
    %102 = vmatprep.subr.mxu0 0.0
    %v103 = vand.u32 %v64, 4294901760
    %104 = vmatpush1.msra.mxu0 %v103
    %105 = vmatprep.subr.mxu0 0.0
    %v106 = vand.u32 %v65, 4294901760
    %107 = vmatpush1.msra.mxu0 %v106
    %108 = vmatprep.subr.mxu0 0.0
    %v109 = vand.u32 %v66, 4294901760
    %110 = vmatpush1.msra.mxu0 %v109
    %111 = vmatprep.subr.mxu0 0.0
    %v112 = vand.u32 %v67, 4294901760
    %113 = vmatpush1.msra.mxu0 %v112
    %114 = vmatprep.subr.mxu0 0.0
    %v115 = vand.u32 %v68, 4294901760
    %116 = vmatpush1.msra.mxu0 %v115
    %117 = vmatprep.subr.mxu0 0.0
    %118 = vmatpush1.msra.mxu0 0.0
    %119 = vmatprep.subr.mxu0 0.0
    %120 = vmatpush1.msra.mxu0 0.0
    %121 = vmatprep.subr.mxu0 0.0
    %122 = vmatpush1.msra.mxu0 0.0
    %123 = vmatprep.subr.mxu0 0.0
    %124 = vmatpush1.msra.mxu0 0.0
    %125 = vmatprep.subr.mxu0 0.0
    %126 = vmatpush1.msra.mxu0 0.0
    %127 = vmatprep.subr.mxu0 0.0
    %128 = vmatpush1.msra.mxu0 0.0
    %129 = vmatprep.subr.mxu0 0.0
    %130 = vmatpush1.msra.mxu0 0.0
    %131 = vmatprep.subr.mxu0 0.0
    %132 = vmatpush1.msra.mxu0 0.0
    %133 = vmatprep.subr.mxu0 0.0
    %134 = vmatpush1.msra.mxu0 0.0
    %135 = vmatprep.subr.mxu0 0.0
    %136 = vmatpush1.msra.mxu0 0.0
    %137 = vmatprep.subr.mxu0 0.0
    %138 = vmatpush1.msra.mxu0 0.0
    %139 = vmatprep.subr.mxu0 0.0
    %140 = vmatpush1.msra.mxu0 0.0
    %141 = vmatprep.subr.mxu0 0.0
    %142 = vmatpush1.msra.mxu0 0.0
    %143 = vmatprep.subr.mxu0 0.0
    %144 = vmatpush1.msra.mxu0 0.0
    %145 = vmatprep.subr.mxu0 0.0
    %146 = vmatpush1.msra.mxu0 0.0
    %147 = vmatprep.subr.mxu0 0.0
    %148 = vmatpush1.msra.mxu0 0.0
    %149 = vmatprep.mubr.f32.mxu0 0.0
    %v150 = vand.u32 %v49, 4294901760
    %v151 = vsub.f32 %v49, %v150
    %v152 = vand.u32 %v151, 4294901760
    %v153 = vsub.f32 %v151, %v152
    %v154 = vand.u32 %v153, 4294901760
    %155 = vmatmul.mubr.f32.gmra.mrb[0].mxu0 %v154
    %v156 = vpop.f32.mrb[0].mxu0
    %v157 = vadd.f32 0.0, %v156
    %v158 = vpop.f32.mrb[0].mxu0
    %159 = vmatprep.mubr.f32.mxu0 0.0
    %v160 = vand.u32 %v50, 4294901760
    %v161 = vsub.f32 %v50, %v160
    %v162 = vand.u32 %v161, 4294901760
    %v163 = vsub.f32 %v161, %v162
    %v164 = vand.u32 %v163, 4294901760
    %165 = vmatmul.mubr.f32.gmra.mrb[0].mxu0 %v164
    %v166 = vpop.f32.mrb[0].mxu0
    %v167 = vadd.f32 0.0, %v166
    %v168 = vpop.f32.mrb[0].mxu0
    %169 = vdwg.mxu0
    %170 = vmatprep.subr.mxu0 0.0
    %v171 = vand.u32 %v53, 4294901760
    %v172 = vsub.f32 %v53, %v171
    %v173 = vand.u32 %v172, 4294901760
    %v174 = vsub.f32 %v172, %v173
    %v175 = vand.u32 %v174, 4294901760
    %176 = vmatpush1.msra.mxu0 %v175
    %177 = vmatprep.subr.mxu0 0.0
    %v178 = vand.u32 %v54, 4294901760
    %v179 = vsub.f32 %v54, %v178
    %v180 = vand.u32 %v179, 4294901760
    %v181 = vsub.f32 %v179, %v180
    %v182 = vand.u32 %v181, 4294901760
    %183 = vmatpush1.msra.mxu0 %v182
    %184 = vmatprep.subr.mxu0 0.0
    %v185 = vand.u32 %v55, 4294901760
    %v186 = vsub.f32 %v55, %v185
    %v187 = vand.u32 %v186, 4294901760
    %v188 = vsub.f32 %v186, %v187
    %v189 = vand.u32 %v188, 4294901760
    %190 = vmatpush1.msra.mxu0 %v189
    %191 = vmatprep.subr.mxu0 0.0
    %v192 = vand.u32 %v56, 4294901760
    %v193 = vsub.f32 %v56, %v192
    %v194 = vand.u32 %v193, 4294901760
    %v195 = vsub.f32 %v193, %v194
    %v196 = vand.u32 %v195, 4294901760
    %197 = vmatpush1.msra.mxu0 %v196
    %198 = vmatprep.subr.mxu0 0.0
    %v199 = vand.u32 %v57, 4294901760
    %v200 = vsub.f32 %v57, %v199
    %v201 = vand.u32 %v200, 4294901760
    %v202 = vsub.f32 %v200, %v201
    %v203 = vand.u32 %v202, 4294901760
    %204 = vmatpush1.msra.mxu0 %v203
    %205 = vmatprep.subr.mxu0 0.0
    %v206 = vand.u32 %v58, 4294901760
    %v207 = vsub.f32 %v58, %v206
    %v208 = vand.u32 %v207, 4294901760
    %v209 = vsub.f32 %v207, %v208
    %v210 = vand.u32 %v209, 4294901760
    %211 = vmatpush1.msra.mxu0 %v210
    %212 = vmatprep.subr.mxu0 0.0
    %v213 = vand.u32 %v59, 4294901760
    %v214 = vsub.f32 %v59, %v213
    %v215 = vand.u32 %v214, 4294901760
    %v216 = vsub.f32 %v214, %v215
    %v217 = vand.u32 %v216, 4294901760
    %218 = vmatpush1.msra.mxu0 %v217
    %219 = vmatprep.subr.mxu0 0.0
    %v220 = vand.u32 %v60, 4294901760
    %v221 = vsub.f32 %v60, %v220
    %v222 = vand.u32 %v221, 4294901760
    %v223 = vsub.f32 %v221, %v222
    %v224 = vand.u32 %v223, 4294901760
    %225 = vmatpush1.msra.mxu0 %v224
    %226 = vmatprep.subr.mxu0 0.0
    %v227 = vand.u32 %v61, 4294901760
    %v228 = vsub.f32 %v61, %v227
    %v229 = vand.u32 %v228, 4294901760
    %v230 = vsub.f32 %v228, %v229
    %v231 = vand.u32 %v230, 4294901760
    %232 = vmatpush1.msra.mxu0 %v231
    %233 = vmatprep.subr.mxu0 0.0
    %v234 = vand.u32 %v62, 4294901760
    %v235 = vsub.f32 %v62, %v234
    %v236 = vand.u32 %v235, 4294901760
    %v237 = vsub.f32 %v235, %v236
    %v238 = vand.u32 %v237, 4294901760
    %239 = vmatpush1.msra.mxu0 %v238
    %240 = vmatprep.subr.mxu0 0.0
    %v241 = vand.u32 %v63, 4294901760
    %v242 = vsub.f32 %v63, %v241
    %v243 = vand.u32 %v242, 4294901760
    %v244 = vsub.f32 %v242, %v243
    %v245 = vand.u32 %v244, 4294901760
    %246 = vmatpush1.msra.mxu0 %v245
    %247 = vmatprep.subr.mxu0 0.0
    %v248 = vand.u32 %v64, 4294901760
    %v249 = vsub.f32 %v64, %v248
    %v250 = vand.u32 %v249, 4294901760
    %v251 = vsub.f32 %v249, %v250
    %v252 = vand.u32 %v251, 4294901760
    %253 = vmatpush1.msra.mxu0 %v252
    %254 = vmatprep.subr.mxu0 0.0
    %v255 = vand.u32 %v65, 4294901760
    %v256 = vsub.f32 %v65, %v255
    %v257 = vand.u32 %v256, 4294901760
    %v258 = vsub.f32 %v256, %v257
    %v259 = vand.u32 %v258, 4294901760
    %260 = vmatpush1.msra.mxu0 %v259
    %261 = vmatprep.subr.mxu0 0.0
    %v262 = vand.u32 %v66, 4294901760
    %v263 = vsub.f32 %v66, %v262
    %v264 = vand.u32 %v263, 4294901760
    %v265 = vsub.f32 %v263, %v264
    %v266 = vand.u32 %v265, 4294901760
    %267 = vmatpush1.msra.mxu0 %v266
    %268 = vmatprep.subr.mxu0 0.0
    %v269 = vand.u32 %v67, 4294901760
    %v270 = vsub.f32 %v67, %v269
    %v271 = vand.u32 %v270, 4294901760
    %v272 = vsub.f32 %v270, %v271
    %v273 = vand.u32 %v272, 4294901760
    %274 = vmatpush1.msra.mxu0 %v273
    %275 = vmatprep.subr.mxu0 0.0
    %v276 = vand.u32 %v68, 4294901760
    %v277 = vsub.f32 %v68, %v276
    %v278 = vand.u32 %v277, 4294901760
    %v279 = vsub.f32 %v277, %v278
    %v280 = vand.u32 %v279, 4294901760
    %281 = vmatpush1.msra.mxu0 %v280
    %282 = vmatprep.subr.mxu0 0.0
    %283 = vmatpush1.msra.mxu0 0.0
    %284 = vmatprep.subr.mxu0 0.0
    %285 = vmatpush1.msra.mxu0 0.0
    %286 = vmatprep.subr.mxu0 0.0
    %287 = vmatpush1.msra.mxu0 0.0
    %288 = vmatprep.subr.mxu0 0.0
    %289 = vmatpush1.msra.mxu0 0.0
    %290 = vmatprep.subr.mxu0 0.0
    %291 = vmatpush1.msra.mxu0 0.0
    %292 = vmatprep.subr.mxu0 0.0
    %293 = vmatpush1.msra.mxu0 0.0
    %294 = vmatprep.subr.mxu0 0.0
    %295 = vmatpush1.msra.mxu0 0.0
    %296 = vmatprep.subr.mxu0 0.0
    %297 = vmatpush1.msra.mxu0 0.0
    %298 = vmatprep.subr.mxu0 0.0
    %299 = vmatpush1.msra.mxu0 0.0
    %300 = vmatprep.subr.mxu0 0.0
    %301 = vmatpush1.msra.mxu0 0.0
    %302 = vmatprep.subr.mxu0 0.0
    %303 = vmatpush1.msra.mxu0 0.0
    %304 = vmatprep.subr.mxu0 0.0
    %305 = vmatpush1.msra.mxu0 0.0
    %306 = vmatprep.subr.mxu0 0.0
    %307 = vmatpush1.msra.mxu0 0.0
    %308 = vmatprep.subr.mxu0 0.0
    %309 = vmatpush1.msra.mxu0 0.0
    %310 = vmatprep.subr.mxu0 0.0
    %311 = vmatpush1.msra.mxu0 0.0
    %312 = vmatprep.subr.mxu0 0.0
    %313 = vmatpush1.msra.mxu0 0.0
    %314 = vmatprep.mubr.f32.mxu0 0.0
    %v315 = vand.u32 %v49, 4294901760
    %316 = vmatmul.mubr.f32.gmra.mrb[0].mxu0 %v315
    %v317 = vpop.f32.mrb[0].mxu0
    %v318 = vadd.f32 %v157, %v317
    %v319 = vpop.f32.mrb[0].mxu0
    %320 = vmatprep.mubr.f32.mxu0 0.0
    %v321 = vand.u32 %v50, 4294901760
    %322 = vmatmul.mubr.f32.gmra.mrb[0].mxu0 %v321
    %v323 = vpop.f32.mrb[0].mxu0
    %v324 = vadd.f32 %v167, %v323
    %v325 = vpop.f32.mrb[0].mxu0
    %326 = vdwg.mxu0
    %327 = vmatprep.subr.mxu0 0.0
    %v328 = vand.u32 %v53, 4294901760
    %v329 = vsub.f32 %v53, %v328
    %330 = vmatpush1.msra.mxu0 %v329
    %331 = vmatprep.subr.mxu0 0.0
    %v332 = vand.u32 %v54, 4294901760
    %v333 = vsub.f32 %v54, %v332
    %334 = vmatpush1.msra.mxu0 %v333
    %335 = vmatprep.subr.mxu0 0.0
    %v336 = vand.u32 %v55, 4294901760
    %v337 = vsub.f32 %v55, %v336
    %338 = vmatpush1.msra.mxu0 %v337
    %339 = vmatprep.subr.mxu0 0.0
    %v340 = vand.u32 %v56, 4294901760
    %v341 = vsub.f32 %v56, %v340
    %342 = vmatpush1.msra.mxu0 %v341
    %343 = vmatprep.subr.mxu0 0.0
    %v344 = vand.u32 %v57, 4294901760
    %v345 = vsub.f32 %v57, %v344
    %346 = vmatpush1.msra.mxu0 %v345
    %347 = vmatprep.subr.mxu0 0.0
    %v348 = vand.u32 %v58, 4294901760
    %v349 = vsub.f32 %v58, %v348
    %350 = vmatpush1.msra.mxu0 %v349
    %351 = vmatprep.subr.mxu0 0.0
    %v352 = vand.u32 %v59, 4294901760
    %v353 = vsub.f32 %v59, %v352
    %354 = vmatpush1.msra.mxu0 %v353
    %355 = vmatprep.subr.mxu0 0.0
    %v356 = vand.u32 %v60, 4294901760
    %v357 = vsub.f32 %v60, %v356
    %358 = vmatpush1.msra.mxu0 %v357
    %359 = vmatprep.subr.mxu0 0.0
    %v360 = vand.u32 %v61, 4294901760
    %v361 = vsub.f32 %v61, %v360
    %362 = vmatpush1.msra.mxu0 %v361
    %363 = vmatprep.subr.mxu0 0.0
    %v364 = vand.u32 %v62, 4294901760
    %v365 = vsub.f32 %v62, %v364
    %366 = vmatpush1.msra.mxu0 %v365
    %367 = vmatprep.subr.mxu0 0.0
    %v368 = vand.u32 %v63, 4294901760
    %v369 = vsub.f32 %v63, %v368
    %370 = vmatpush1.msra.mxu0 %v369
    %371 = vmatprep.subr.mxu0 0.0
    %v372 = vand.u32 %v64, 4294901760
    %v373 = vsub.f32 %v64, %v372
    %374 = vmatpush1.msra.mxu0 %v373
    %375 = vmatprep.subr.mxu0 0.0
    %v376 = vand.u32 %v65, 4294901760
    %v377 = vsub.f32 %v65, %v376
    %378 = vmatpush1.msra.mxu0 %v377
    %379 = vmatprep.subr.mxu0 0.0
    %v380 = vand.u32 %v66, 4294901760
    %v381 = vsub.f32 %v66, %v380
    %382 = vmatpush1.msra.mxu0 %v381
    %383 = vmatprep.subr.mxu0 0.0
    %v384 = vand.u32 %v67, 4294901760
    %v385 = vsub.f32 %v67, %v384
    %386 = vmatpush1.msra.mxu0 %v385
    %387 = vmatprep.subr.mxu0 0.0
    %v388 = vand.u32 %v68, 4294901760
    %v389 = vsub.f32 %v68, %v388
    %390 = vmatpush1.msra.mxu0 %v389
    %391 = vmatprep.subr.mxu0 0.0
    %392 = vmatpush1.msra.mxu0 0.0
    %393 = vmatprep.subr.mxu0 0.0
    %394 = vmatpush1.msra.mxu0 0.0
    %395 = vmatprep.subr.mxu0 0.0
    %396 = vmatpush1.msra.mxu0 0.0
    %397 = vmatprep.subr.mxu0 0.0
    %398 = vmatpush1.msra.mxu0 0.0
    %399 = vmatprep.subr.mxu0 0.0
    %400 = vmatpush1.msra.mxu0 0.0
    %401 = vmatprep.subr.mxu0 0.0
    %402 = vmatpush1.msra.mxu0 0.0
    %403 = vmatprep.subr.mxu0 0.0
    %404 = vmatpush1.msra.mxu0 0.0
    %405 = vmatprep.subr.mxu0 0.0
    %406 = vmatpush1.msra.mxu0 0.0
    %407 = vmatprep.subr.mxu0 0.0
    %408 = vmatpush1.msra.mxu0 0.0
    %409 = vmatprep.subr.mxu0 0.0
    %410 = vmatpush1.msra.mxu0 0.0
    %411 = vmatprep.subr.mxu0 0.0
    %412 = vmatpush1.msra.mxu0 0.0
    %413 = vmatprep.subr.mxu0 0.0
    %414 = vmatpush1.msra.mxu0 0.0
    %415 = vmatprep.subr.mxu0 0.0
    %416 = vmatpush1.msra.mxu0 0.0
    %417 = vmatprep.subr.mxu0 0.0
    %418 = vmatpush1.msra.mxu0 0.0
    %419 = vmatprep.subr.mxu0 0.0
    %420 = vmatpush1.msra.mxu0 0.0
    %421 = vmatprep.subr.mxu0 0.0
    %422 = vmatpush1.msra.mxu0 0.0
    %423 = vmatprep.mubr.f32.mxu0 0.0
    %v424 = vand.u32 %v49, 4294901760
    %v425 = vsub.f32 %v49, %v424
    %426 = vmatmul.mubr.f32.gmra.mrb[0].mxu0 %v425
    %v427 = vpop.f32.mrb[0].mxu0
    %v428 = vadd.f32 %v318, %v427
    %v429 = vpop.f32.mrb[0].mxu0
    %430 = vmatprep.mubr.f32.mxu0 0.0
    %v431 = vand.u32 %v50, 4294901760
    %v432 = vsub.f32 %v50, %v431
    %433 = vmatmul.mubr.f32.gmra.mrb[0].mxu0 %v432
    %v434 = vpop.f32.mrb[0].mxu0
    %v435 = vadd.f32 %v324, %v434
    %v436 = vpop.f32.mrb[0].mxu0
    %437 = vdwg.mxu0
    %438 = vmatprep.subr.mxu0 0.0
    %v439 = vand.u32 %v53, 4294901760
    %440 = vmatpush1.msra.mxu0 %v439
    %441 = vmatprep.subr.mxu0 0.0
    %v442 = vand.u32 %v54, 4294901760
    %443 = vmatpush1.msra.mxu0 %v442
    %444 = vmatprep.subr.mxu0 0.0
    %v445 = vand.u32 %v55, 4294901760
    %446 = vmatpush1.msra.mxu0 %v445
    %447 = vmatprep.subr.mxu0 0.0
    %v448 = vand.u32 %v56, 4294901760
    %449 = vmatpush1.msra.mxu0 %v448
    %450 = vmatprep.subr.mxu0 0.0
    %v451 = vand.u32 %v57, 4294901760
    %452 = vmatpush1.msra.mxu0 %v451
    %453 = vmatprep.subr.mxu0 0.0
    %v454 = vand.u32 %v58, 4294901760
    %455 = vmatpush1.msra.mxu0 %v454
    %456 = vmatprep.subr.mxu0 0.0
    %v457 = vand.u32 %v59, 4294901760
    %458 = vmatpush1.msra.mxu0 %v457
    %459 = vmatprep.subr.mxu0 0.0
    %v460 = vand.u32 %v60, 4294901760
    %461 = vmatpush1.msra.mxu0 %v460
    %462 = vmatprep.subr.mxu0 0.0
    %v463 = vand.u32 %v61, 4294901760
    %464 = vmatpush1.msra.mxu0 %v463
    %465 = vmatprep.subr.mxu0 0.0
    %v466 = vand.u32 %v62, 4294901760
    %467 = vmatpush1.msra.mxu0 %v466
    %468 = vmatprep.subr.mxu0 0.0
    %v469 = vand.u32 %v63, 4294901760
    %470 = vmatpush1.msra.mxu0 %v469
    %471 = vmatprep.subr.mxu0 0.0
    %v472 = vand.u32 %v64, 4294901760
    %473 = vmatpush1.msra.mxu0 %v472
    %474 = vmatprep.subr.mxu0 0.0
    %v475 = vand.u32 %v65, 4294901760
    %476 = vmatpush1.msra.mxu0 %v475
    %477 = vmatprep.subr.mxu0 0.0
    %v478 = vand.u32 %v66, 4294901760
    %479 = vmatpush1.msra.mxu0 %v478
    %480 = vmatprep.subr.mxu0 0.0
    %v481 = vand.u32 %v67, 4294901760
    %482 = vmatpush1.msra.mxu0 %v481
    %483 = vmatprep.subr.mxu0 0.0
    %v484 = vand.u32 %v68, 4294901760
    %485 = vmatpush1.msra.mxu0 %v484
    %486 = vmatprep.subr.mxu0 0.0
    %487 = vmatpush1.msra.mxu0 0.0
    %488 = vmatprep.subr.mxu0 0.0
    %489 = vmatpush1.msra.mxu0 0.0
    %490 = vmatprep.subr.mxu0 0.0
    %491 = vmatpush1.msra.mxu0 0.0
    %492 = vmatprep.subr.mxu0 0.0
    %493 = vmatpush1.msra.mxu0 0.0
    %494 = vmatprep.subr.mxu0 0.0
    %495 = vmatpush1.msra.mxu0 0.0
    %496 = vmatprep.subr.mxu0 0.0
    %497 = vmatpush1.msra.mxu0 0.0
    %498 = vmatprep.subr.mxu0 0.0
    %499 = vmatpush1.msra.mxu0 0.0
    %500 = vmatprep.subr.mxu0 0.0
    %501 = vmatpush1.msra.mxu0 0.0
    %502 = vmatprep.subr.mxu0 0.0
    %503 = vmatpush1.msra.mxu0 0.0
    %504 = vmatprep.subr.mxu0 0.0
    %505 = vmatpush1.msra.mxu0 0.0
    %506 = vmatprep.subr.mxu0 0.0
    %507 = vmatpush1.msra.mxu0 0.0
    %508 = vmatprep.subr.mxu0 0.0
    %509 = vmatpush1.msra.mxu0 0.0
    %510 = vmatprep.subr.mxu0 0.0
    %511 = vmatpush1.msra.mxu0 0.0
    %512 = vmatprep.subr.mxu0 0.0
    %513 = vmatpush1.msra.mxu0 0.0
    %514 = vmatprep.subr.mxu0 0.0
    %515 = vmatpush1.msra.mxu0 0.0
    %516 = vmatprep.subr.mxu0 0.0
    %517 = vmatpush1.msra.mxu0 0.0
    %518 = vmatprep.mubr.f32.mxu0 0.0
    %v519 = vand.u32 %v49, 4294901760
    %v520 = vsub.f32 %v49, %v519
    %v521 = vand.u32 %v520, 4294901760
    %522 = vmatmul.mubr.f32.gmra.mrb[0].mxu0 %v521
    %v523 = vpop.f32.mrb[0].mxu0
    %v524 = vadd.f32 %v428, %v523
    %v525 = vpop.f32.mrb[0].mxu0
    %526 = vmatprep.mubr.f32.mxu0 0.0
    %v527 = vand.u32 %v50, 4294901760
    %v528 = vsub.f32 %v50, %v527
    %v529 = vand.u32 %v528, 4294901760
    %530 = vmatmul.mubr.f32.gmra.mrb[0].mxu0 %v529
    %v531 = vpop.f32.mrb[0].mxu0
    %v532 = vadd.f32 %v435, %v531
    %v533 = vpop.f32.mrb[0].mxu0
    %534 = vdwg.mxu0
    %535 = vmatprep.subr.mxu0 0.0
    %v536 = vand.u32 %v53, 4294901760
    %v537 = vsub.f32 %v53, %v536
    %v538 = vand.u32 %v537, 4294901760
    %539 = vmatpush1.msra.mxu0 %v538
    %540 = vmatprep.subr.mxu0 0.0
    %v541 = vand.u32 %v54, 4294901760
    %v542 = vsub.f32 %v54, %v541
    %v543 = vand.u32 %v542, 4294901760
    %544 = vmatpush1.msra.mxu0 %v543
    %545 = vmatprep.subr.mxu0 0.0
    %v546 = vand.u32 %v55, 4294901760
    %v547 = vsub.f32 %v55, %v546
    %v548 = vand.u32 %v547, 4294901760
    %549 = vmatpush1.msra.mxu0 %v548
    %550 = vmatprep.subr.mxu0 0.0
    %v551 = vand.u32 %v56, 4294901760
    %v552 = vsub.f32 %v56, %v551
    %v553 = vand.u32 %v552, 4294901760
    %554 = vmatpush1.msra.mxu0 %v553
    %555 = vmatprep.subr.mxu0 0.0
    %v556 = vand.u32 %v57, 4294901760
    %v557 = vsub.f32 %v57, %v556
    %v558 = vand.u32 %v557, 4294901760
    %559 = vmatpush1.msra.mxu0 %v558
    %560 = vmatprep.subr.mxu0 0.0
    %v561 = vand.u32 %v58, 4294901760
    %v562 = vsub.f32 %v58, %v561
    %v563 = vand.u32 %v562, 4294901760
    %564 = vmatpush1.msra.mxu0 %v563
    %565 = vmatprep.subr.mxu0 0.0
    %v566 = vand.u32 %v59, 4294901760
    %v567 = vsub.f32 %v59, %v566
    %v568 = vand.u32 %v567, 4294901760
    %569 = vmatpush1.msra.mxu0 %v568
    %570 = vmatprep.subr.mxu0 0.0
    %v571 = vand.u32 %v60, 4294901760
    %v572 = vsub.f32 %v60, %v571
    %v573 = vand.u32 %v572, 4294901760
    %574 = vmatpush1.msra.mxu0 %v573
    %575 = vmatprep.subr.mxu0 0.0
    %v576 = vand.u32 %v61, 4294901760
    %v577 = vsub.f32 %v61, %v576
    %v578 = vand.u32 %v577, 4294901760
    %579 = vmatpush1.msra.mxu0 %v578
    %580 = vmatprep.subr.mxu0 0.0
    %v581 = vand.u32 %v62, 4294901760
    %v582 = vsub.f32 %v62, %v581
    %v583 = vand.u32 %v582, 4294901760
    %584 = vmatpush1.msra.mxu0 %v583
    %585 = vmatprep.subr.mxu0 0.0
    %v586 = vand.u32 %v63, 4294901760
    %v587 = vsub.f32 %v63, %v586
    %v588 = vand.u32 %v587, 4294901760
    %589 = vmatpush1.msra.mxu0 %v588
    %590 = vmatprep.subr.mxu0 0.0
    %v591 = vand.u32 %v64, 4294901760
    %v592 = vsub.f32 %v64, %v591
    %v593 = vand.u32 %v592, 4294901760
    %594 = vmatpush1.msra.mxu0 %v593
    %595 = vmatprep.subr.mxu0 0.0
    %v596 = vand.u32 %v65, 4294901760
    %v597 = vsub.f32 %v65, %v596
    %v598 = vand.u32 %v597, 4294901760
    %599 = vmatpush1.msra.mxu0 %v598
    %600 = vmatprep.subr.mxu0 0.0
    %v601 = vand.u32 %v66, 4294901760
    %v602 = vsub.f32 %v66, %v601
    %v603 = vand.u32 %v602, 4294901760
    %604 = vmatpush1.msra.mxu0 %v603
    %605 = vmatprep.subr.mxu0 0.0
    %v606 = vand.u32 %v67, 4294901760
    %v607 = vsub.f32 %v67, %v606
    %v608 = vand.u32 %v607, 4294901760
    %609 = vmatpush1.msra.mxu0 %v608
    %610 = vmatprep.subr.mxu0 0.0
    %v611 = vand.u32 %v68, 4294901760
    %v612 = vsub.f32 %v68, %v611
    %v613 = vand.u32 %v612, 4294901760
    %614 = vmatpush1.msra.mxu0 %v613
    %615 = vmatprep.subr.mxu0 0.0
    %616 = vmatpush1.msra.mxu0 0.0
    %617 = vmatprep.subr.mxu0 0.0
    %618 = vmatpush1.msra.mxu0 0.0
    %619 = vmatprep.subr.mxu0 0.0
    %620 = vmatpush1.msra.mxu0 0.0
    %621 = vmatprep.subr.mxu0 0.0
    %622 = vmatpush1.msra.mxu0 0.0
    %623 = vmatprep.subr.mxu0 0.0
    %624 = vmatpush1.msra.mxu0 0.0
    %625 = vmatprep.subr.mxu0 0.0
    %626 = vmatpush1.msra.mxu0 0.0
    %627 = vmatprep.subr.mxu0 0.0
    %628 = vmatpush1.msra.mxu0 0.0
    %629 = vmatprep.subr.mxu0 0.0
    %630 = vmatpush1.msra.mxu0 0.0
    %631 = vmatprep.subr.mxu0 0.0
    %632 = vmatpush1.msra.mxu0 0.0
    %633 = vmatprep.subr.mxu0 0.0
    %634 = vmatpush1.msra.mxu0 0.0
    %635 = vmatprep.subr.mxu0 0.0
    %636 = vmatpush1.msra.mxu0 0.0
    %637 = vmatprep.subr.mxu0 0.0
    %638 = vmatpush1.msra.mxu0 0.0
    %639 = vmatprep.subr.mxu0 0.0
    %640 = vmatpush1.msra.mxu0 0.0
    %641 = vmatprep.subr.mxu0 0.0
    %642 = vmatpush1.msra.mxu0 0.0
    %643 = vmatprep.subr.mxu0 0.0
    %644 = vmatpush1.msra.mxu0 0.0
    %645 = vmatprep.subr.mxu0 0.0
    %646 = vmatpush1.msra.mxu0 0.0
    %647 = vmatprep.mubr.f32.mxu0 0.0
    %v648 = vand.u32 %v49, 4294901760
    %649 = vmatmul.mubr.f32.gmra.mrb[0].mxu0 %v648
    %v650 = vpop.f32.mrb[0].mxu0
    %v651 = vadd.f32 %v524, %v650
    %v652 = vpop.f32.mrb[0].mxu0
    %653 = vmatprep.mubr.f32.mxu0 0.0
    %v654 = vand.u32 %v50, 4294901760
    %655 = vmatmul.mubr.f32.gmra.mrb[0].mxu0 %v654
    %v656 = vpop.f32.mrb[0].mxu0
    %v657 = vadd.f32 %v532, %v656
    %v658 = vpop.f32.mrb[0].mxu0
    %659 = vdwg.mxu0
    %660 = vmatprep.subr.mxu0 0.0
    %v661 = vand.u32 %v53, 4294901760
    %662 = vmatpush1.msra.mxu0 %v661
    %663 = vmatprep.subr.mxu0 0.0
    %v664 = vand.u32 %v54, 4294901760
    %665 = vmatpush1.msra.mxu0 %v664
    %666 = vmatprep.subr.mxu0 0.0
    %v667 = vand.u32 %v55, 4294901760
    %668 = vmatpush1.msra.mxu0 %v667
    %669 = vmatprep.subr.mxu0 0.0
    %v670 = vand.u32 %v56, 4294901760
    %671 = vmatpush1.msra.mxu0 %v670
    %672 = vmatprep.subr.mxu0 0.0
    %v673 = vand.u32 %v57, 4294901760
    %674 = vmatpush1.msra.mxu0 %v673
    %675 = vmatprep.subr.mxu0 0.0
    %v676 = vand.u32 %v58, 4294901760
    %677 = vmatpush1.msra.mxu0 %v676
    %678 = vmatprep.subr.mxu0 0.0
    %v679 = vand.u32 %v59, 4294901760
    %680 = vmatpush1.msra.mxu0 %v679
    %681 = vmatprep.subr.mxu0 0.0
    %v682 = vand.u32 %v60, 4294901760
    %683 = vmatpush1.msra.mxu0 %v682
    %684 = vmatprep.subr.mxu0 0.0
    %v685 = vand.u32 %v61, 4294901760
    %686 = vmatpush1.msra.mxu0 %v685
    %687 = vmatprep.subr.mxu0 0.0
    %v688 = vand.u32 %v62, 4294901760
    %689 = vmatpush1.msra.mxu0 %v688
    %690 = vmatprep.subr.mxu0 0.0
    %v691 = vand.u32 %v63, 4294901760
    %692 = vmatpush1.msra.mxu0 %v691
    %693 = vmatprep.subr.mxu0 0.0
    %v694 = vand.u32 %v64, 4294901760
    %695 = vmatpush1.msra.mxu0 %v694
    %696 = vmatprep.subr.mxu0 0.0
    %v697 = vand.u32 %v65, 4294901760
    %698 = vmatpush1.msra.mxu0 %v697
    %699 = vmatprep.subr.mxu0 0.0
    %v700 = vand.u32 %v66, 4294901760
    %701 = vmatpush1.msra.mxu0 %v700
    %702 = vmatprep.subr.mxu0 0.0
    %v703 = vand.u32 %v67, 4294901760
    %704 = vmatpush1.msra.mxu0 %v703
    %705 = vmatprep.subr.mxu0 0.0
    %v706 = vand.u32 %v68, 4294901760
    %707 = vmatpush1.msra.mxu0 %v706
    %708 = vmatprep.subr.mxu0 0.0
    %709 = vmatpush1.msra.mxu0 0.0
    %710 = vmatprep.subr.mxu0 0.0
    %711 = vmatpush1.msra.mxu0 0.0
    %712 = vmatprep.subr.mxu0 0.0
    %713 = vmatpush1.msra.mxu0 0.0
    %714 = vmatprep.subr.mxu0 0.0
    %715 = vmatpush1.msra.mxu0 0.0
    %716 = vmatprep.subr.mxu0 0.0
    %717 = vmatpush1.msra.mxu0 0.0
    %718 = vmatprep.subr.mxu0 0.0
    %719 = vmatpush1.msra.mxu0 0.0
    %720 = vmatprep.subr.mxu0 0.0
    %721 = vmatpush1.msra.mxu0 0.0
    %722 = vmatprep.subr.mxu0 0.0
    %723 = vmatpush1.msra.mxu0 0.0
    %724 = vmatprep.subr.mxu0 0.0
    %725 = vmatpush1.msra.mxu0 0.0
    %726 = vmatprep.subr.mxu0 0.0
    %727 = vmatpush1.msra.mxu0 0.0
    %728 = vmatprep.subr.mxu0 0.0
    %729 = vmatpush1.msra.mxu0 0.0
    %730 = vmatprep.subr.mxu0 0.0
    %731 = vmatpush1.msra.mxu0 0.0
    %732 = vmatprep.subr.mxu0 0.0
    %733 = vmatpush1.msra.mxu0 0.0
    %734 = vmatprep.subr.mxu0 0.0
    %735 = vmatpush1.msra.mxu0 0.0
    %736 = vmatprep.subr.mxu0 0.0
    %737 = vmatpush1.msra.mxu0 0.0
    %738 = vmatprep.subr.mxu0 0.0
    %739 = vmatpush1.msra.mxu0 0.0
    %740 = vmatprep.mubr.f32.mxu0 0.0
    %v741 = vand.u32 %v49, 4294901760
    %742 = vmatmul.mubr.f32.gmra.mrb[0].mxu0 %v741
    %v743 = vpop.f32.mrb[0].mxu0
    %v744 = vadd.f32 %v651, %v743
    %v745 = vpop.f32.mrb[0].mxu0
    %746 = vmatprep.mubr.f32.mxu0 0.0
    %v747 = vand.u32 %v50, 4294901760
    %748 = vmatmul.mubr.f32.gmra.mrb[0].mxu0 %v747
    %v749 = vpop.f32.mrb[0].mxu0
    %v750 = vadd.f32 %v657, %v749
    %v751 = vpop.f32.mrb[0].mxu0
    %752 = vdwg.mxu0
    %v753 = vadd.f32 %v51, %v744
    %v754 = vadd.f32 %v52, %v750
    %755 = vst [vmem:[#allocation2] sm:$0xff] %v753
    %756 = vst [vmem:[#allocation2 + $0x8] sm:$0xff] %v754
    // Predicated region
    $region18: #{tpu_custom_call.1} parent=1 // pred_check
      %p757 = pneg %p26
    $region19: #{tpu_custom_call.1} parent=1 // pred_check_branch
      %759 = sbr.rel (%p757) target = $region21
    $region20: #{tpu_custom_call.1} parent=1 // pred_region
      %v760 = vld [vmem:[#allocation2] sm:$0xff]
      %v761 = vld [vmem:[#allocation2 + $0x8] sm:$0xff]
      %762 = vst [vmem:[#allocation6] sm:$0xff] %v760
      %763 = vst [vmem:[#allocation6 + $0x8] sm:$0xff] %v761
    $region21: #{tpu_custom_call.1} parent=1 // pred_fallthru
      _
    // Predicated region
    $region22: #{tpu_custom_call.1} parent=1 // pred_check
      _
    $region23: #{tpu_custom_call.1} parent=1 // pred_check_branch
      %765 = sbr.rel (0) target = $region25
    $region24: #{tpu_custom_call.1} parent=1 // pred_region
      %s767 = ssub.s32 256, 256
      %768 = vsyncadd [#allocation5], %s767
      %s769 = sshll.u32 [#allocation6], 4
      %s770 = int_to_ptr.vmem [resolvable:$true] %s769
      %775 = dma.vmem_to_hbm [thread:$0]  %s770, 256, %s2, [#allocation5], 128, 128, 8
    $region25: #{tpu_custom_call.1} parent=1 // pred_fallthru
      _
    // Predicated region
    $region26: #{tpu_custom_call.1} parent=1 // pred_check
      _
    $region27: #{tpu_custom_call.1} parent=1 // pred_check_branch
      %777 = sbr.rel (0) target = $region29
    $region28: #{tpu_custom_call.1} parent=1 // pred_region
      %778 = dma.done [#allocation5], 256
    $region29: #{tpu_custom_call.1} parent=1 // pred_fallthru
      _
    %779 = vsyncpa [#allocation4], 1
    %780 = vsyncpa [#allocation5], 1

</llo_original>
